<compile_context>
chip_gen: v5e
topology: v5e:2x2
jax: 0.10.0
libtpu: 0.0.40
codegen_flags: <defaults>
</compile_context>

<pallas_src>
import jax
import jax.numpy as jnp
from jax.experimental import pallas as pl
from jax.experimental.pallas import tpu as pltpu


def classifier_kernel(idx_ref, table_ref, o_ref):
    """One-hot gather from the fused (emb @ W.T + b) table.

    idx_ref   : (TILE_N, 1)       int32   token ids for this tile
    table_ref : (n_ops, n_ops)    float32 fused table, VMEM-resident
    o_ref     : (TILE_N, n_ops)   float32 logits for this tile
    """
    idx = idx_ref[...]                                   # (TILE_N, 1) int32
    tile_n = idx.shape[0]
    n_ops = table_ref.shape[0]

    # One-hot gather expressed as a matmul -> single MXU op, exact row select.
    # iota/compare is built once per kernel invocation (hoisted, no inner loop).
    col = jax.lax.broadcasted_iota(jnp.int32, (tile_n, n_ops), 1)
    onehot = (col == idx).astype(jnp.float32)             # (TILE_N, n_ops)
    o_ref[...] = jnp.dot(onehot, table_ref[...],
                         preferred_element_type=jnp.float32)


def _round_up(x, m):
    return (x + m - 1) // m * m


def classifier_forward(x_idx, emb_table, fc_weight, fc_bias):
    """x_idx: int token ids, arbitrary leading shape.
    emb_table: (n_ops, emb_dim); fc_weight: (n_ops, emb_dim); fc_bias: (n_ops,).
    Returns logits of shape x_idx.shape + (n_ops,), float32.
    """
    n_ops, emb_dim = emb_table.shape
    orig_shape = x_idx.shape

    # Precompute the fused table once (plain XLA): row i == fc(emb_row_i).
    fused_table = (jnp.dot(emb_table.astype(jnp.float32),
                           fc_weight.astype(jnp.float32).T)
                   + fc_bias.astype(jnp.float32)[None, :])      # (n_ops, n_ops)

    idx_flat = x_idx.reshape(-1, 1).astype(jnp.int32)            # (N, 1)
    n = idx_flat.shape[0]

    # Tile choice: <=256 rows (multiple of 8) keeps one-hot vreg pressure low.
    tile_n = min(256, _round_up(n, 8))
    n_padded = _round_up(n, tile_n)
    if n_padded != n:
        idx_flat = jnp.pad(idx_flat, ((0, n_padded - n), (0, 0)))

    out = pl.pallas_call(
        classifier_kernel,
        out_shape=jax.ShapeDtypeStruct((n_padded, n_ops), jnp.float32),
        grid=(n_padded // tile_n,),
        in_specs=[
            # Streamed per-tile token ids.
            pl.BlockSpec((tile_n, 1), lambda i: (i, 0)),
            # Fused table stays resident across all grid steps.
            pl.BlockSpec((n_ops, n_ops), lambda i: (0, 0)),
        ],
        out_specs=pl.BlockSpec((tile_n, n_ops), lambda i: (i, 0)),
        compiler_params=pltpu.CompilerParams(
            dimension_semantics=("parallel",)),
    )(idx_flat, fused_table)

    return out[:n].reshape(*orig_shape, n_ops)


if __name__ == "__main__":
    # Small, deterministic setup consistent with Classifier(n_ops, emb_dim=16)
    n_ops = 10
    emb_dim = 16
    batch, seq = 2, 8

    key = jax.random.PRNGKey(0)
    k_emb, k_w, k_b, k_x = jax.random.split(key, 4)

    # nn.Embedding default init ~ N(0, 1); nn.Linear ~ U(-1/sqrt(fan_in), ...)
    emb_table = jax.random.normal(k_emb, (n_ops, emb_dim), dtype=jnp.float32)
    bound = 1.0 / (emb_dim ** 0.5)
    fc_weight = jax.random.uniform(k_w, (n_ops, emb_dim), dtype=jnp.float32,
                                   minval=-bound, maxval=bound)
    fc_bias = jax.random.uniform(k_b, (n_ops,), dtype=jnp.float32,
                                 minval=-bound, maxval=bound)

    x = jax.random.randint(k_x, (batch, seq), 0, n_ops, dtype=jnp.int32)

    logits = classifier_forward(x, emb_table, fc_weight, fc_bias)
    logits = jax.block_until_ready(logits)

    # Reference check in plain JAX (same math as PyTorch forward)
    ref = jnp.take(emb_table, x, axis=0) @ fc_weight.T + fc_bias
    assert logits.shape == (batch, seq, n_ops)
    assert jnp.allclose(logits, ref, atol=1e-5, rtol=1e-5)

    print("KERNEL_OK")
</pallas_src>

<mosaic_0001>
module attributes {stable_mosaic.version = 11 : i64} {
  func.func @classifier_kernel(%arg0: i32, %arg1: memref<16x1xi32, #tpu.memory_space<vmem>>, %arg2: memref<10x10xf32, #tpu.memory_space<vmem>>, %arg3: memref<16x10xf32, #tpu.memory_space<vmem>>) attributes {dimension_semantics = [#tpu.dimension_semantics<parallel>], iteration_bounds = array<i64: 1>, scalar_prefetch = 0 : i64, scratch_operands = 0 : i64, tpu.core_type = #tpu.core_type<tc>, window_params = [{transform_indices = @transform_0, window_bounds = array<i64: 16, 1>}, {pipeline_mode = #tpu.pipeline_mode<synchronous>, transform_indices = @transform_1, window_bounds = array<i64: 10, 10>}, {transform_indices = @transform_2, window_bounds = array<i64: 16, 10>}]} {
    %c0 = arith.constant 0 : index
    %c0_0 = arith.constant 0 : index
    %0 = vector.load %arg1[%c0, %c0_0] : memref<16x1xi32, #tpu.memory_space<vmem>>, vector<16x1xi32>
    %1 = tpu.iota {dimensions = array<i32: 1>} : vector<16x10xi32>
    %2 = vector.broadcast %0 : vector<16x1xi32> to vector<16x10xi32>
    %3 = arith.cmpi eq, %1, %2 : vector<16x10xi32>
    %4 = arith.extui %3 : vector<16x10xi1> to vector<16x10xi32>
    %5 = arith.sitofp %4 : vector<16x10xi32> to vector<16x10xf32>
    %c0_1 = arith.constant 0 : index
    %c0_2 = arith.constant 0 : index
    %6 = vector.load %arg2[%c0_1, %c0_2] : memref<10x10xf32, #tpu.memory_space<vmem>>, vector<10x10xf32>
    %cst = arith.constant dense<0.000000e+00> : vector<16x10xf32>
    %7 = tpu.matmul %5, %6, %cst {dimension_numbers = #tpu.dot_dimension_numbers<[1], [0], [0], [1], [0, 0, 1, 1], [], []>} : vector<16x10xf32>, vector<10x10xf32>, vector<16x10xf32> -> vector<16x10xf32>
    %c0_3 = arith.constant 0 : index
    %c0_4 = arith.constant 0 : index
    %8 = vector.load %arg3[%c0_3, %c0_4] : memref<16x10xf32, #tpu.memory_space<vmem>>, vector<16x10xf32>
    tpu.vector_store %arg3[%c0_3, %c0_4], %7 {strides = array<i32>} : memref<16x10xf32, #tpu.memory_space<vmem>>, vector<16x10xf32>,
    return
  }
  func.func @transform_0(%arg0: i32) -> (i32, i32) {
    %c0_i32 = arith.constant 0 : i32
    %c0_i32_0 = arith.constant 0 : i32
    return %arg0, %c0_i32 : i32, i32
  }
  func.func @transform_1(%arg0: i32) -> (i32, i32) {
    %c0_i32 = arith.constant 0 : i32
    %c0_i32_0 = arith.constant 0 : i32
    %c0_i32_1 = arith.constant 0 : i32
    return %c0_i32, %c0_i32_0 : i32, i32
  }
  func.func @transform_2(%arg0: i32) -> (i32, i32) {
    %c0_i32 = arith.constant 0 : i32
    %c0_i32_0 = arith.constant 0 : i32
    return %arg0, %c0_i32 : i32, i32
  }
}

</mosaic_0001>

<llo_original>
// kernel: tpu_custom_call.1
$region0: #{tpu_custom_call.1}
  #allocation0 [shape = 'u32[]', space=smem, size = 0x4, offset = 0x4, fixed_abs, tag = 'smem constant byte address 0x4 - core index']
  #allocation1 [shape = 'u32[72,128]{1,0:T(1,128)}', space=vmem, size = 0x9000, scoped, tag = 'internal scratch']
  %s0 = inlined_call_operand.vmem [shape: s32[16,1], index: 0, kind: input, shape index: {}]
  %s1 = inlined_call_operand.vmem [shape: f32[10,10], index: 1, kind: input, shape index: {}]
  %s2 = inlined_call_operand.hbm [shape: f32[16,10], index: 2, kind: output, shape index: {}]
  %s3 = sld [smem:[#allocation0]]
  $region18: #{tpu_custom_call.1} parent=0
    _
  %s5 = ssub.s32 1, %s3
  %s6 = scalar_select 0, %s5, %s3
  $region1: #{tpu_custom_call.1} parent=0
    #allocation2 [shape = 'u8[8192]{0}', space=vmem, size = 0x2000, scoped, tag = 'output window, operand 0, single buffered']
    #allocation3 [shape = 's32[1]{0}', space=sflag, size = 0x4, scoped, tag = 'scoped memory for tpu_custom_call.1']
    %7 = vsyncpa [#allocation3], 0
    // Predicated region
    $region2: #{tpu_custom_call.1} parent=1 // pred_check
      _
    $region3: #{tpu_custom_call.1} parent=1 // pred_check_branch
      %9 = sbr.rel (0) target = $region5
    $region4: #{tpu_custom_call.1} parent=1 // pred_region
      _
    $region5: #{tpu_custom_call.1} parent=1 // pred_fallthru
      _
    // Predicated region
    $region6: #{tpu_custom_call.1} parent=1 // pred_check
      _
    $region7: #{tpu_custom_call.1} parent=1 // pred_check_branch
      %11 = sbr.rel (0) target = $region9
    $region8: #{tpu_custom_call.1} parent=1 // pred_region
      _
    $region9: #{tpu_custom_call.1} parent=1 // pred_fallthru
      _
    %v12 = vld [vmem:[%s0] sm:$0xff]
    %v13 = vld [vmem:[%s0 + $0x8] sm:$0xff]
    %v14 = vlaneseq
    %v15 = vand.u32 %v14, 127
    %16 = vset.pattern.permute.xlu0 0
    %17 = vperm.xlu0 %16, %v12
    %v18 = vpop.permute.xlu0 %17
    %19 = vset.pattern.permute.xlu0 0
    %20 = vperm.xlu0 %19, %v13
    %v21 = vpop.permute.xlu0 %20
    %vm22 = vcmp.eq.s32.totalorder %v15, %v18
    %vm23 = vcmp.eq.s32.totalorder %v15, %v21
    %v24 = vsel %vm22, 1, 0
    %v25 = vsel %vm23, 1, 0
    %v26 = vcvt.s32.f32 %v24
    %v27 = vcvt.s32.f32 %v25
    %v28 = vld [vmem:[%s1] sm:$0xff]
    %v29 = vld [vmem:[%s1 + $0x8] sm:$0x3]
    %vm30 = vcmask 80896
    %v32 = vsel %vm30, %v26, 0
    %v35 = vsel %vm30, %v27, 0
    %vm37 = vcmask 1041408
    %v39 = vsel %vm37, %v29, 0
    %41 = vmatpush.msra.mxu0 0.0
    %42 = vmatpush.msra.mxu0 0.0
    %43 = vmatpush.msra.mxu0 0.0
    %44 = vmatpush.msra.mxu0 0.0
    %45 = vmatpush.msra.mxu0 0.0
    %46 = vmatpush.msra.mxu0 0.0
    %47 = vmatpush.msra.mxu0 0.0
    %48 = vmatpush.msra.mxu0 0.0
    %49 = vmatpush.msra.mxu0 0.0
    %50 = vmatpush.msra.mxu0 0.0
    %51 = vmatpush.msra.mxu0 0.0
    %52 = vmatpush.msra.mxu0 0.0
    %53 = vmatpush.msra.mxu0 0.0
    %54 = vmatpush.msra.mxu0 0.0
    %55 = vmatpush.msra.mxu0 %v39
    %56 = vmatpush.msra.mxu0 %v28
    %57 = vmatmul.f32.gmra.mxu0 %v32
    %v58 = vpop.f32.mrf.mxu0
    %v59 = vadd.f32 0.0, %v58
    %60 = vmatmul.f32.gmra.mxu0 %v35
    %v61 = vpop.f32.mrf.mxu0
    %v62 = vadd.f32 0.0, %v61
    %63 = vdwg.mxu0
    %64 = vst.msk [vmem:[#allocation2] sm:$0xff] %vm30, %v59
    %65 = vst.msk [vmem:[#allocation2 + $0x8] sm:$0xff] %vm30, %v62
    // Predicated region
    $region10: #{tpu_custom_call.1} parent=1 // pred_check
      _
    $region11: #{tpu_custom_call.1} parent=1 // pred_check_branch
      %67 = sbr.rel (0) target = $region13
    $region12: #{tpu_custom_call.1} parent=1 // pred_region
      %69 = vsyncadd [#allocation3], 0
      %s70 = sshll.u32 [#allocation2], 4
      %s71 = int_to_ptr.vmem [resolvable:$true] %s70
      %s72 = sshll.u32 %s2, 4
      %s73 = int_to_ptr.hbm [resolvable:$true] %s72
      %78 = dma.vmem_to_hbm [thread:$0]  %s71, 256, %s73, [#allocation3], 128, 128, 8
    $region13: #{tpu_custom_call.1} parent=1 // pred_fallthru
      _
    // Predicated region
    $region14: #{tpu_custom_call.1} parent=1 // pred_check
      _
    $region15: #{tpu_custom_call.1} parent=1 // pred_check_branch
      %80 = sbr.rel (0) target = $region17
    $region16: #{tpu_custom_call.1} parent=1 // pred_region
      %82 = dma.done [#allocation3], 256
    $region17: #{tpu_custom_call.1} parent=1 // pred_fallthru
      _
    %83 = vsyncpa [#allocation3], 1

</llo_original>
